<compile_context>
chip_gen: v6e
topology: v6e:2x2x1
jax: 0.10.0
libtpu: 0.0.40
codegen_flags: <defaults>
</compile_context>

<pallas_src>
import functools

import jax
import jax.numpy as jnp
from jax.experimental import pallas as pl
from jax.experimental.pallas import tpu as pltpu


def _smooth_ce_kernel(x_ref, tgt_ref, part_ref, *, smoothing, n_rows, tile_n,
                      n_classes):
    """One row-tile: writes the tile's partial loss sum (lane-dense slab)."""
    confidence = 1.0 - smoothing
    smooth_per_class = smoothing / n_classes

    # TODO(synk): on v6e/v7x the compare/select/multiply path could stay in
    # bf16 (native bf16 VALU); kept in f32 so the same kernel is correct on
    # v5e (no bf16 VPU/EUP) and exp/accumulation needs f32 anyway.
    x = x_ref[...].astype(jnp.float32)                          # (TILE_N, C)
    tgt = tgt_ref[...]                                          # (TILE_N, 1) int32

    # Per-row logsumexp -- no (TILE_N, C) logprobs materialization.
    m = jnp.max(x, axis=-1, keepdims=True)                      # (TILE_N, 1)
    sumexp = jnp.sum(jnp.exp(x - m), axis=-1, keepdims=True)    # (TILE_N, 1)
    lse = m + jnp.log(sumexp)                                   # (TILE_N, 1)

    # Fused gather + smoothing term: one weighted lane reduction.
    #   loss_i = lse_i - sum_c x[i,c] * (conf*onehot + smooth/C)
    cls_ids = jax.lax.broadcasted_iota(jnp.int32, x.shape, 1)
    w = jnp.where(cls_ids == tgt, confidence + smooth_per_class,
                  smooth_per_class)
    loss = lse - jnp.sum(x * w, axis=-1, keepdims=True)         # (TILE_N, 1)

    # Mask rows past the true batch size (partial last block carries garbage
    # data from the clipped DMA).  Must stay BEFORE any cross-row reduction.
    row_ids = (pl.program_id(0) * tile_n
               + jax.lax.broadcasted_iota(jnp.int32, loss.shape, 0))
    loss = jnp.where(row_ids < n_rows, loss, 0.0)

    # Partial sum for this block, broadcast over a lane-dense (1, 8, 128) slab.
    part_ref[...] = jnp.broadcast_to(jnp.sum(loss), part_ref.shape)


def _choose_tile_n(n, c, itemsize):
    """Row-tile size: ~6 MiB per logits block, dtype-aware sublane multiple.

    The 4096-row cap bounds the lane-padded (TILE_N, 1) int32 target buffer
    (TILE_N*128*4 B per pipeline buffer); with double buffering the whole
    pipeline stays <= ~20 MiB, safe on v7x's 64 MiB VMEM and big enough to
    approach the HBM roofline on v5e/v6e.
    """
    sublane = 8 if itemsize >= 4 else (16 if itemsize == 2 else 32)
    budget_bytes = 6 * 1024 * 1024
    t = budget_bytes // max(1, c * itemsize)
    t = max(sublane, (t // sublane) * sublane)
    t = min(t, 4096)
    if n <= t:
        # Small N: force (at least) 2 blocks so the "parallel" grid axis can
        # shard across both TensorCores on v7x (neutral on v5e/v6e).
        half = -(-n // 2)
        t = max(sublane, ((half + sublane - 1) // sublane) * sublane)
    return int(t)


def smooth_cross_entropy_loss(x, target, smoothing=0.0, reduction="mean"):
    """Pallas equivalent of SmoothCrossEntropyLoss(smoothing, reduction)."""
    if reduction not in ("mean", "sum"):
        # TODO(synk): reduction='none' (per-row loss output) not implemented.
        raise NotImplementedError("only reduction in {'mean','sum'} supported")

    n, c = x.shape
    itemsize = jnp.dtype(x.dtype).itemsize
    tile_n = _choose_tile_n(n, c, itemsize)
    num_blocks = -(-n // tile_n)

    # No jnp.pad of x / target: ragged last block is handled by the clipped
    # block DMA + in-kernel row mask.
    tgt2d = target.astype(jnp.int32).reshape(n, 1)

    kernel = functools.partial(
        _smooth_ce_kernel,
        smoothing=float(smoothing),
        n_rows=n,
        tile_n=tile_n,
        n_classes=c,
    )

    # Honest one-pass accounting with the true N (no pad copy).
    cost = pl.CostEstimate(
        flops=6 * n * c,
        transcendentals=n * c,
        bytes_accessed=n * c * itemsize + n * 4 + num_blocks * 8 * 128 * 4,
    )

    partials = pl.pallas_call(
        kernel,
        out_shape=jax.ShapeDtypeStruct((num_blocks, 8, 128), jnp.float32),
        grid=(num_blocks,),
        in_specs=[
            pl.BlockSpec((tile_n, c), lambda i: (i, 0)),   # logits row tile
            pl.BlockSpec((tile_n, 1), lambda i: (i, 0)),   # target row tile
        ],
        out_specs=pl.BlockSpec((1, 8, 128), lambda i: (i, 0, 0)),
        compiler_params=pltpu.CompilerParams(
            dimension_semantics=("parallel",),
            # Plenty of headroom for the <=~20 MiB pipeline; still safe on
            # v7x's 64 MiB physical VMEM and raises the v5e 16 MiB default.
            vmem_limit_bytes=48 * 1024 * 1024,
        ),
        cost_estimate=cost,
    )(x, tgt2d)

    total = jnp.sum(partials[:, 0, 0])
    if reduction == "sum":
        return total
    return total / n


def _reference(x, target, smoothing, reduction="mean"):
    confidence = 1.0 - smoothing
    logprobs = jax.nn.log_softmax(x.astype(jnp.float32), axis=-1)
    nll = -jnp.take_along_axis(logprobs, target[:, None].astype(jnp.int32),
                               axis=-1)[:, 0]
    smooth = -jnp.mean(logprobs, axis=-1)
    loss = confidence * nll + smoothing * smooth
    return jnp.sum(loss) if reduction == "sum" else jnp.mean(loss)


if __name__ == "__main__":
    key = jax.random.PRNGKey(0)
    k1, k2, k3, k4, k5, k6, k7, k8 = jax.random.split(key, 8)

    # Case 1: small f32, N a multiple of the sublane tile.
    N1, C1, sm1 = 8, 32, 0.1
    x1 = jax.random.normal(k1, (N1, C1), dtype=jnp.float32)
    t1 = jax.random.randint(k2, (N1,), 0, C1, dtype=jnp.int32)
    out1 = jax.block_until_ready(smooth_cross_entropy_loss(x1, t1, smoothing=sm1))
    ref1 = _reference(x1, t1, sm1)
    assert jnp.allclose(out1, ref1, atol=1e-4, rtol=1e-4), (out1, ref1)

    # Case 2: ragged N (exercises partial last block, no padding) + 'sum'.
    N2, C2, sm2 = 13, 40, 0.2
    x2 = jax.random.normal(k3, (N2, C2), dtype=jnp.float32)
    t2 = jax.random.randint(k4, (N2,), 0, C2, dtype=jnp.int32)
    out2 = jax.block_until_ready(
        smooth_cross_entropy_loss(x2, t2, smoothing=sm2, reduction="sum"))
    ref2 = _reference(x2, t2, sm2, reduction="sum")
    assert jnp.allclose(out2, ref2, atol=1e-4, rtol=1e-4), (out2, ref2)

    # Case 3: bf16 logits (halves HBM bytes; upcast to f32 inside the kernel).
    N3, C3, sm3 = 32, 128, 0.05
    x3 = jax.random.normal(k5, (N3, C3), dtype=jnp.float32).astype(jnp.bfloat16)
    t3 = jax.random.randint(k6, (N3,), 0, C3, dtype=jnp.int32)
    out3 = jax.block_until_ready(smooth_cross_entropy_loss(x3, t3, smoothing=sm3))
    ref3 = _reference(x3, t3, sm3)
    assert jnp.allclose(out3, ref3, atol=1e-4, rtol=1e-4), (out3, ref3)

    # Case 4: multi-block ragged f32 (2 blocks, partial last block, no pad).
    N4, C4, sm4 = 300, 512, 0.15
    x4 = jax.random.normal(k7, (N4, C4), dtype=jnp.float32)
    t4 = jax.random.randint(k8, (N4,), 0, C4, dtype=jnp.int32)
    out4 = jax.block_until_ready(smooth_cross_entropy_loss(x4, t4, smoothing=sm4))
    ref4 = _reference(x4, t4, sm4)
    assert jnp.allclose(out4, ref4, atol=1e-4, rtol=1e-4), (out4, ref4)

    print("KERNEL_OK")
</pallas_src>

<mosaic_0001>
module attributes {stable_mosaic.version = 11 : i64} {
  func.func @_smooth_ce_kernel(%arg0: i32, %arg1: memref<8x32xf32, #tpu.memory_space<vmem>>, %arg2: memref<8x1xi32, #tpu.memory_space<vmem>>, %arg3: memref<1x8x128xf32, #tpu.memory_space<vmem>>) attributes {dimension_semantics = [#tpu.dimension_semantics<parallel>], iteration_bounds = array<i64: 1>, scalar_prefetch = 0 : i64, scratch_operands = 0 : i64, tpu.core_type = #tpu.core_type<tc>, window_params = [{transform_indices = @transform_0, window_bounds = array<i64: 8, 32>}, {transform_indices = @transform_1, window_bounds = array<i64: 8, 1>}, {transform_indices = @transform_2, window_bounds = array<i64: 1, 8, 128>}]} {
    %c0 = arith.constant 0 : index
    %c0_0 = arith.constant 0 : index
    %0 = vector.load %arg1[%c0, %c0_0] : memref<8x32xf32, #tpu.memory_space<vmem>>, vector<8x32xf32>
    %c0_1 = arith.constant 0 : index
    %c0_2 = arith.constant 0 : index
    %1 = vector.load %arg2[%c0_1, %c0_2] : memref<8x1xi32, #tpu.memory_space<vmem>>, vector<8x1xi32>
    %cst = arith.constant dense<0xFF800000> : vector<8xf32>
    %2 = vector.multi_reduction <maximumf>, %0, %cst [1] : vector<8x32xf32> to vector<8xf32>
    %3 = vector.shape_cast %2 : vector<8xf32> to vector<8x1xf32>
    %4 = vector.broadcast %3 : vector<8x1xf32> to vector<8x32xf32>
    %5 = arith.subf %0, %4 : vector<8x32xf32>
    %6 = math.exp %5 : vector<8x32xf32>
    %cst_3 = arith.constant dense<0.000000e+00> : vector<8xf32>
    %7 = vector.multi_reduction <add>, %6, %cst_3 [1] : vector<8x32xf32> to vector<8xf32>
    %8 = vector.shape_cast %7 : vector<8xf32> to vector<8x1xf32>
    %9 = math.log %8 : vector<8x1xf32>
    %10 = arith.addf %3, %9 : vector<8x1xf32>
    %11 = tpu.iota {dimensions = array<i32: 1>} : vector<8x32xi32>
    %12 = vector.broadcast %1 : vector<8x1xi32> to vector<8x32xi32>
    %13 = arith.cmpi eq, %11, %12 : vector<8x32xi32>
    %cst_4 = arith.constant 0.903124988 : f32
    %cst_5 = arith.constant 3.125000e-03 : f32
    %14 = vector.broadcast %cst_4 : f32 to vector<8x32xf32>
    %15 = vector.broadcast %cst_5 : f32 to vector<8x32xf32>
    %16 = arith.select %13, %14, %15 : vector<8x32xi1>, vector<8x32xf32>
    %17 = arith.mulf %0, %16 : vector<8x32xf32>
    %cst_6 = arith.constant dense<0.000000e+00> : vector<8xf32>
    %18 = vector.multi_reduction <add>, %17, %cst_6 [1] : vector<8x32xf32> to vector<8xf32>
    %19 = vector.shape_cast %18 : vector<8xf32> to vector<8x1xf32>
    %20 = arith.subf %10, %19 : vector<8x1xf32>
    %c8_i32 = arith.constant 8 : i32
    %21 = arith.muli %arg0, %c8_i32 : i32
    %22 = tpu.iota {dimensions = array<i32: 0>} : vector<8x1xi32>
    %23 = vector.broadcast %21 : i32 to vector<8x1xi32>
    %24 = arith.addi %23, %22 : vector<8x1xi32>
    %c8_i32_7 = arith.constant 8 : i32
    %25 = vector.broadcast %c8_i32_7 : i32 to vector<8x1xi32>
    %26 = arith.cmpi slt, %24, %25 : vector<8x1xi32>
    %cst_8 = arith.constant 0.000000e+00 : f32
    %27 = vector.broadcast %cst_8 : f32 to vector<8x1xf32>
    %28 = arith.select %26, %20, %27 : vector<8x1xi1>, vector<8x1xf32>
    %29 = vector.shape_cast %28 : vector<8x1xf32> to vector<1x8x1xf32>
    %cst_9 = arith.constant dense<0.000000e+00> : vector<1xf32>
    %30 = vector.multi_reduction <add>, %29, %cst_9 [1, 2] : vector<1x8x1xf32> to vector<1xf32>
    %31 = vector.shape_cast %30 : vector<1xf32> to vector<1x1x1xf32>
    %32 = vector.extract %31[0, 0, 0] : f32 from vector<1x1x1xf32>
    %33 = vector.broadcast %32 : f32 to vector<1x8x128xf32>
    %c0_10 = arith.constant 0 : index
    %c0_11 = arith.constant 0 : index
    %c0_12 = arith.constant 0 : index
    %34 = vector.load %arg3[%c0_10, %c0_11, %c0_12] : memref<1x8x128xf32, #tpu.memory_space<vmem>>, vector<1x8x128xf32>
    tpu.vector_store %arg3[%c0_10, %c0_11, %c0_12], %33 {strides = array<i32>} : memref<1x8x128xf32, #tpu.memory_space<vmem>>, vector<1x8x128xf32>,
    return
  }
  func.func @transform_0(%arg0: i32) -> (i32, i32) {
    %c0_i32 = arith.constant 0 : i32
    %c0_i32_0 = arith.constant 0 : i32
    return %arg0, %c0_i32 : i32, i32
  }
  func.func @transform_1(%arg0: i32) -> (i32, i32) {
    %c0_i32 = arith.constant 0 : i32
    %c0_i32_0 = arith.constant 0 : i32
    return %arg0, %c0_i32 : i32, i32
  }
  func.func @transform_2(%arg0: i32) -> (i32, i32, i32) {
    %c0_i32 = arith.constant 0 : i32
    %c0_i32_0 = arith.constant 0 : i32
    %c0_i32_1 = arith.constant 0 : i32
    return %arg0, %c0_i32, %c0_i32_0 : i32, i32, i32
  }
}

</mosaic_0001>

<llo_original>
// kernel: tpu_custom_call.1
$region0: #{tpu_custom_call.1}
  #allocation0 [shape = 'u32[]', space=smem, size = 0x4, offset = 0x4, fixed_abs, tag = 'smem constant byte address 0x4 - core index']
  #allocation1 [shape = 'u32[144,128]{1,0:T(1,128)}', space=vmem, size = 0x12000, scoped, tag = 'internal scratch']
  %s0 = inlined_call_operand.vmem [shape: f32[8,32], index: 0, kind: input, shape index: {}]
  %s1 = inlined_call_operand.vmem [shape: s32[8,1], index: 1, kind: input, shape index: {}]
  %s2 = inlined_call_operand.hbm [shape: f32[1,8,128], index: 2, kind: output, shape index: {}]
  %s3 = sld [smem:[#allocation0]]
  $region18: #{tpu_custom_call.1} parent=0
    _
  %s5 = ssub.s32 1, %s3
  %s6 = scalar_select 0, %s5, %s3
  $region1: #{tpu_custom_call.1} parent=0
    #allocation2 [shape = 'u8[4096]{0}', space=vmem, size = 0x1000, scoped, tag = 'output window, operand 0, single buffered']
    #allocation3 [shape = 's32[1]{0}', space=sflag, size = 0x4, scoped, tag = 'scoped memory for tpu_custom_call.1']
    %7 = vsyncpa [#allocation3], 0
    // Predicated region
    $region2: #{tpu_custom_call.1} parent=1 // pred_check
      _
    $region3: #{tpu_custom_call.1} parent=1 // pred_check_branch
      %9 = sbr.rel (0) target = $region5
    $region4: #{tpu_custom_call.1} parent=1 // pred_region
      _
    $region5: #{tpu_custom_call.1} parent=1 // pred_fallthru
      _
    // Predicated region
    $region6: #{tpu_custom_call.1} parent=1 // pred_check
      _
    $region7: #{tpu_custom_call.1} parent=1 // pred_check_branch
      %11 = sbr.rel (0) target = $region9
    $region8: #{tpu_custom_call.1} parent=1 // pred_region
      _
    $region9: #{tpu_custom_call.1} parent=1 // pred_fallthru
      _
    %v12 = vld [vmem:[%s0] sm:$0xff]
    %v13 = vld [vmem:[%s1] sm:$0xff]
    %vm14 = vcmask 261120
    %v15 = vsel %vm14, %v12, -inf
    %16 = vmax.xlane.f32.xlu0 %v15
    %v17 = vpop.xlane.xlu0 %16
    %v18 = vsub.f32 %v12, %v17
    %v19 = vmul.f32 %v18, 1.442695
    %v20 = vpow.pop %v19
    %v21 = vsel %vm14, %v20, 0.0
    %22 = vadd.xlane.f32.xlu0 %v21
    %v23 = vpop.xlane.xlu0 %22
    %v24 = vlog2.pop %v23
    %v25 = vmul.f32 %v24, 0.6931472
    %v26 = vadd.f32 %v17, %v25
    %v27 = vlaneseq
    %v28 = vand.u32 %v27, 127
    %29 = vset.pattern.permute.xlu0 0
    %30 = vperm.xlu0 %29, %v13
    %v31 = vpop.permute.xlu0 %30
    %vm32 = vcmp.eq.s32.totalorder %v28, %v31
    %v33 = vsel %vm32, 0.903125, 0.003125
    %v34 = vmul.f32 %v12, %v33
    %v35 = vsel %vm14, %v34, 0.0
    %36 = vadd.xlane.f32.xlu0 %v35
    %v37 = vpop.xlane.xlu0 %36
    %v38 = vsub.f32 %v26, %v37
    %s39 = smul.u32 0, 8
    %v40 = vlaneseq
    %v41 = vshrl.u32 %v40, 7
    %v42 = vstv %s39
    %v43 = vadd.s32 %v42, %v41
    %vm44 = vcmp.lt.s32.totalorder %v43, 8
    %v45 = vsel %vm44, %v38, 0.0
    %vm46 = vcmask 7168
    %v47 = vsel %vm46, %v45, 0.0
    %48 = vadd.xlane.f32.xlu0 %v47
    %v49 = vpop.xlane.xlu0 %48
    %v50 = vrot.slane %v49, 4
    %v51 = vadd.f32 %v49, %v50
    %v52 = vrot.slane %v51, 2
    %v53 = vadd.f32 %v51, %v52
    %v54 = vrot.slane %v53, 1
    %v55 = vadd.f32 %v53, %v54
    %s56 = vtos %v55
    %v57 = vstv %s56
    %58 = vst [vmem:[#allocation2] sm:$0xff] %v57
    // Predicated region
    $region10: #{tpu_custom_call.1} parent=1 // pred_check
      _
    $region11: #{tpu_custom_call.1} parent=1 // pred_check_branch
      %60 = sbr.rel (0) target = $region13
    $region12: #{tpu_custom_call.1} parent=1 // pred_region
      %s62 = ssub.s32 128, 128
      %63 = vsyncadd [#allocation3], %s62
      %s65 = sshll.u32 [#allocation2], 4
      %s66 = int_to_ptr.vmem [resolvable:$true] %s65
      %68 = dma.vmem_to_hbm [thread:$0]  %s66, 128, %s2, [#allocation3]
    $region13: #{tpu_custom_call.1} parent=1 // pred_fallthru
      _
    // Predicated region
    $region14: #{tpu_custom_call.1} parent=1 // pred_check
      _
    $region15: #{tpu_custom_call.1} parent=1 // pred_check_branch
      %70 = sbr.rel (0) target = $region17
    $region16: #{tpu_custom_call.1} parent=1 // pred_region
      %71 = dma.done [#allocation3], 128
    $region17: #{tpu_custom_call.1} parent=1 // pred_fallthru
      _
    %72 = vsyncpa [#allocation3], 1

</llo_original>
